<compile_context>
chip_gen: v6e
topology: v6e:2x2x1
jax: 0.10.0
libtpu: 0.0.40
codegen_flags: <defaults>
</compile_context>

<pallas_src>
import jax
import jax.numpy as jnp
from jax.experimental import pallas as pl
from jax.experimental.pallas import tpu as pltpu

_EPS = 1e-6


def _iter_loss_kernel(coef_ref,                      # scalar-prefetch: (T,) f32 in SMEM
                      pred_ref, gt_ref, mask_ref,    # VMEM tiles
                      out_ref,                       # (1, 1, 128) per-tile partials
                      acc_ref):                      # VMEM scratch (TR, 128) f32
    t = pl.program_id(1)
    t_last = pl.num_programs(1) - 1

    pred = pred_ref[0].astype(jnp.float32)      # (TR, 128)
    gt = gt_ref[...].astype(jnp.float32)        # (TR, 128) -- resident across T

    # Pure-VPU hot loop: weighted |pred - gt| (mask is hoisted out of the T loop).
    w = coef_ref[t]
    contrib = jnp.abs(pred - gt) * w

    @pl.when(t == 0)
    def _():
        acc_ref[...] = contrib

    @pl.when(t > 0)
    def _():
        acc_ref[...] = acc_ref[...] + contrib

    # Mask multiply + cross-lane reductions only once per spatial tile.
    @pl.when(t == t_last)
    def _():
        mask = mask_ref[...].astype(jnp.float32)   # (TR, 128) -- fetched once per tile
        num = jnp.sum(acc_ref[...] * mask)
        den = jnp.sum(mask)
        lane = jax.lax.broadcasted_iota(jnp.int32, (1, 1, 128), 2)
        out_ref[...] = jnp.where(lane == 0, num,
                                 jnp.where(lane == 1, den, jnp.float32(0.0)))


def _choose_tiling(R, max_rows=2048):
    """Pick (TR, S, R_pad): tile rows, number of spatial tiles, padded rows.

    - Tiny inputs (R <= 8): single full-extent block (always a legal block shape).
    - Otherwise: TR is a multiple of 8, capped at max_rows, and chosen so that
      S >= 2 (shards across v7x's two TensorCores). R is zero-padded up to S*TR.
    """
    if R <= 8:
        return R, 1, R
    half = -(-R // 2)               # ceil(R / 2)
    half8 = -(-half // 8) * 8       # round up to a multiple of 8 (sublane)
    tr = min(max_rows, half8)
    s = -(-R // tr)
    return tr, s, s * tr


def iteration_loss(preds, gt, mask, *, iter_decay=1.0, additional_decay=None):
    """preds: (T, B, H, W); gt, mask: (B, H, W).  Returns scalar total loss."""
    T = preds.shape[0]
    N = int(gt.size)
    R = -(-N // 128)                         # rows of 128 lanes
    TR, S, R_pad = _choose_tiling(R)
    N_pad = R_pad * 128

    # Flatten; zero-pad ragged sizes (mask=0 padding keeps num and den exact).
    # Inputs are streamed in their native dtype (supply bf16 upstream to halve
    # HBM traffic); no wrapper-side casts.
    def _prep2d(x):
        flat = x.reshape(-1)
        if N_pad != N:
            flat = jnp.pad(flat, (0, N_pad - N))
        return flat.reshape(R_pad, 128)

    preds_flat = preds.reshape(T, -1)
    if N_pad != N:
        preds_flat = jnp.pad(preds_flat, ((0, 0), (0, N_pad - N)))
    preds3 = preds_flat.reshape(T, R_pad, 128)
    gt2 = _prep2d(gt)
    mask2 = _prep2d(mask)

    # Fold the decay recurrence into per-iteration coefficients:
    #   without additional_decay: total = sum_i d^(T-1-i) * loss_i
    #   with additional_decay:    total = sum_{i<T-1} d^(T-2-i)*loss_i
    #                                     + additional_decay * loss_{T-1}
    n = T if additional_decay is None else T - 1
    coef_list = [float(iter_decay) ** (n - 1 - i) for i in range(n)]
    if additional_decay is not None:
        coef_list.append(float(additional_decay))
    coefs = jnp.asarray(coef_list, dtype=jnp.float32)

    grid_spec = pltpu.PrefetchScalarGridSpec(
        num_scalar_prefetch=1,
        grid=(S, T),                       # spatial tiles outer (parallel), T inner
        in_specs=[
            pl.BlockSpec((1, TR, 128), lambda s, t, coef: (t, s, 0)),   # preds
            pl.BlockSpec((TR, 128),    lambda s, t, coef: (s, 0)),      # gt (resident over T)
            pl.BlockSpec((TR, 128),    lambda s, t, coef: (s, 0)),      # mask (resident over T)
        ],
        out_specs=[
            pl.BlockSpec((1, 1, 128),  lambda s, t, coef: (s, 0, 0)),   # per-tile (num, den)
        ],
        scratch_shapes=[pltpu.VMEM((TR, 128), jnp.float32)],
    )

    bytes_accessed = int(T * N_pad * preds3.dtype.itemsize
                         + N_pad * (gt2.dtype.itemsize + mask2.dtype.itemsize)
                         + S * 128 * 4)
    cost = pl.CostEstimate(flops=int(4 * T * N_pad + 3 * N_pad),
                           transcendentals=0,
                           bytes_accessed=bytes_accessed)

    parts = pl.pallas_call(
        _iter_loss_kernel,
        grid_spec=grid_spec,
        out_shape=(jax.ShapeDtypeStruct((S, 1, 128), jnp.float32),),
        compiler_params=pltpu.CompilerParams(
            dimension_semantics=("parallel", "arbitrary"),
            vmem_limit_bytes=32 << 20),
        cost_estimate=cost,
    )(coefs, preds3, gt2, mask2)[0]

    # Tiny final combine (S partials) + single divide in plain JAX.
    num = jnp.sum(parts[:, 0, 0])
    den = jnp.sum(parts[:, 0, 1])
    return num / (den + _EPS)


def _reference(preds, gt, mask, iter_decay, additional_decay):
    """Pure-JAX mirror of IterationLoss.forward with the masked-L1 inner loss."""
    def inner(p):
        return jnp.sum(jnp.abs(p - gt) * mask) / (jnp.sum(mask) + _EPS)

    T = preds.shape[0]
    n = T - 1 if additional_decay is not None else T
    total = jnp.float32(0.0)
    for i in range(n):
        total = total * iter_decay + inner(preds[i])
    if additional_decay is not None:
        total = total + inner(preds[n]) * additional_decay
    return total


if __name__ == "__main__":
    key = jax.random.PRNGKey(0)
    iter_decay = 0.9
    additional_decay = 0.5

    # TODO(synk): AbstractLoss is abstract in the source; the concrete inner
    # loss here is a standard masked mean-L1 stereo loss.

    def run_case(T, B, H, W, add_decay):
        k1, k2, k3 = jax.random.split(jax.random.fold_in(key, T * 1000 + H), 3)
        preds = jax.random.normal(k1, (T, B, H, W), dtype=jnp.float32) * 2.0
        gt = jax.random.normal(k2, (B, H, W), dtype=jnp.float32) * 2.0
        msk = (jax.random.uniform(k3, (B, H, W)) > 0.3).astype(jnp.float32)
        out = jax.block_until_ready(
            iteration_loss(preds, gt, msk,
                           iter_decay=iter_decay, additional_decay=add_decay))
        ref = _reference(preds, gt, msk, iter_decay, add_decay)
        assert jnp.allclose(out, ref, rtol=1e-5, atol=1e-5), (T, B, H, W, out, ref)

    # Base case (num_iter=4, batch=2, 16x16 disparity) — both decay paths.
    run_case(4, 2, 16, 16, additional_decay)
    run_case(4, 2, 16, 16, None)
    # Ragged spatial size (N not a multiple of 128) exercises zero-padding.
    run_case(3, 2, 17, 15, additional_decay)
    # Larger spatial size exercises S >= 2 (multi-tile / megacore path).
    run_case(4, 2, 32, 32, additional_decay)

    print("KERNEL_OK")
</pallas_src>

<mosaic_0001>
module attributes {stable_mosaic.version = 11 : i64} {
  func.func @_iter_loss_kernel(%arg0: i32, %arg1: i32, %arg2: memref<4xf32, #tpu.memory_space<smem>>, %arg3: memref<1x4x128xf32, #tpu.memory_space<vmem>>, %arg4: memref<4x128xf32, #tpu.memory_space<vmem>>, %arg5: memref<4x128xf32, #tpu.memory_space<vmem>>, %arg6: memref<1x1x128xf32, #tpu.memory_space<vmem>>, %arg7: memref<4x128xf32, #tpu.memory_space<vmem>>) attributes {dimension_semantics = [#tpu.dimension_semantics<parallel>, #tpu.dimension_semantics<arbitrary>], iteration_bounds = array<i64: 1, 4>, scalar_prefetch = 1 : i64, scratch_operands = 1 : i64, tpu.core_type = #tpu.core_type<tc>, window_params = [{transform_indices = @transform_0, window_bounds = array<i64: 1, 4, 128>}, {transform_indices = @transform_1, window_bounds = array<i64: 4, 128>}, {transform_indices = @transform_2, window_bounds = array<i64: 4, 128>}, {transform_indices = @transform_3, window_bounds = array<i64: 1, 1, 128>}]} {
    %c0 = arith.constant 0 : index
    %c0_0 = arith.constant 0 : index
    %c0_1 = arith.constant 0 : index
    %0 = vector.load %arg3[%c0, %c0_0, %c0_1] : memref<1x4x128xf32, #tpu.memory_space<vmem>>, vector<1x4x128xf32>
    %1 = vector.shape_cast %0 : vector<1x4x128xf32> to vector<4x128xf32>
    %c0_2 = arith.constant 0 : index
    %c0_3 = arith.constant 0 : index
    %2 = vector.load %arg4[%c0_2, %c0_3] : memref<4x128xf32, #tpu.memory_space<vmem>>, vector<4x128xf32>
    %3 = arith.index_cast %arg1 : i32 to index
    %4 = memref.load %arg2[%3] : memref<4xf32, #tpu.memory_space<smem>>
    %5 = arith.subf %1, %2 : vector<4x128xf32>
    %6 = math.absf %5 : vector<4x128xf32>
    %7 = vector.broadcast %4 : f32 to vector<4x128xf32>
    %8 = arith.mulf %6, %7 : vector<4x128xf32>
    %c0_i32 = arith.constant 0 : i32
    %9 = arith.cmpi eq, %arg1, %c0_i32 : i32
    %10 = arith.extui %9 : i1 to i32
    %c0_i32_4 = arith.constant 0 : i32
    %11 = arith.cmpi ne, %10, %c0_i32_4 : i32
    scf.if %11 {
      %c0_8 = arith.constant 0 : index
      %c0_9 = arith.constant 0 : index
      %18 = vector.load %arg7[%c0_8, %c0_9] : memref<4x128xf32, #tpu.memory_space<vmem>>, vector<4x128xf32>
      tpu.vector_store %arg7[%c0_8, %c0_9], %8 {strides = array<i32>} : memref<4x128xf32, #tpu.memory_space<vmem>>, vector<4x128xf32>,
    } else {
    }
    %c0_i32_5 = arith.constant 0 : i32
    %12 = arith.cmpi sgt, %arg1, %c0_i32_5 : i32
    %13 = arith.extui %12 : i1 to i32
    %c0_i32_6 = arith.constant 0 : i32
    %14 = arith.cmpi ne, %13, %c0_i32_6 : i32
    scf.if %14 {
      %c0_8 = arith.constant 0 : index
      %c0_9 = arith.constant 0 : index
      %18 = vector.load %arg7[%c0_8, %c0_9] : memref<4x128xf32, #tpu.memory_space<vmem>>, vector<4x128xf32>
      %19 = arith.addf %18, %8 : vector<4x128xf32>
      %c0_10 = arith.constant 0 : index
      %c0_11 = arith.constant 0 : index
      %20 = vector.load %arg7[%c0_10, %c0_11] : memref<4x128xf32, #tpu.memory_space<vmem>>, vector<4x128xf32>
      tpu.vector_store %arg7[%c0_10, %c0_11], %19 {strides = array<i32>} : memref<4x128xf32, #tpu.memory_space<vmem>>, vector<4x128xf32>,
    } else {
    }
    %c3_i32 = arith.constant 3 : i32
    %15 = arith.cmpi eq, %arg1, %c3_i32 : i32
    %16 = arith.extui %15 : i1 to i32
    %c0_i32_7 = arith.constant 0 : i32
    %17 = arith.cmpi ne, %16, %c0_i32_7 : i32
    scf.if %17 {
      %c0_8 = arith.constant 0 : index
      %c0_9 = arith.constant 0 : index
      %18 = vector.load %arg5[%c0_8, %c0_9] : memref<4x128xf32, #tpu.memory_space<vmem>>, vector<4x128xf32>
      %c0_10 = arith.constant 0 : index
      %c0_11 = arith.constant 0 : index
      %19 = vector.load %arg7[%c0_10, %c0_11] : memref<4x128xf32, #tpu.memory_space<vmem>>, vector<4x128xf32>
      %20 = arith.mulf %19, %18 : vector<4x128xf32>
      %21 = vector.shape_cast %20 : vector<4x128xf32> to vector<1x4x128xf32>
      %cst = arith.constant dense<0.000000e+00> : vector<1xf32>
      %22 = vector.multi_reduction <add>, %21, %cst [1, 2] : vector<1x4x128xf32> to vector<1xf32>
      %23 = vector.shape_cast %22 : vector<1xf32> to vector<1x1x1xf32>
      %24 = vector.extract %23[0, 0, 0] : f32 from vector<1x1x1xf32>
      %25 = vector.shape_cast %18 : vector<4x128xf32> to vector<1x4x128xf32>
      %cst_12 = arith.constant dense<0.000000e+00> : vector<1xf32>
      %26 = vector.multi_reduction <add>, %25, %cst_12 [1, 2] : vector<1x4x128xf32> to vector<1xf32>
      %27 = vector.shape_cast %26 : vector<1xf32> to vector<1x1x1xf32>
      %28 = vector.extract %27[0, 0, 0] : f32 from vector<1x1x1xf32>
      %29 = tpu.iota {dimensions = array<i32: 2>} : vector<1x1x128xi32>
      %c0_i32_13 = arith.constant 0 : i32
      %30 = vector.broadcast %c0_i32_13 : i32 to vector<1x1x128xi32>
      %31 = arith.cmpi eq, %29, %30 : vector<1x1x128xi32>
      %c1_i32 = arith.constant 1 : i32
      %32 = vector.broadcast %c1_i32 : i32 to vector<1x1x128xi32>
      %33 = arith.cmpi eq, %29, %32 : vector<1x1x128xi32>
      %cst_14 = arith.constant 0.000000e+00 : f32
      %34 = vector.broadcast %28 : f32 to vector<1x1x128xf32>
      %35 = vector.broadcast %cst_14 : f32 to vector<1x1x128xf32>
      %36 = arith.select %33, %34, %35 : vector<1x1x128xi1>, vector<1x1x128xf32>
      %37 = vector.broadcast %24 : f32 to vector<1x1x128xf32>
      %38 = arith.select %31, %37, %36 : vector<1x1x128xi1>, vector<1x1x128xf32>
      %c0_15 = arith.constant 0 : index
      %c0_16 = arith.constant 0 : index
      %c0_17 = arith.constant 0 : index
      %39 = vector.load %arg6[%c0_15, %c0_16, %c0_17] : memref<1x1x128xf32, #tpu.memory_space<vmem>>, vector<1x1x128xf32>
      tpu.vector_store %arg6[%c0_15, %c0_16, %c0_17], %38 {strides = array<i32>} : memref<1x1x128xf32, #tpu.memory_space<vmem>>, vector<1x1x128xf32>,
    } else {
    }
    return
  }
  func.func @transform_0(%arg0: i32, %arg1: i32, %arg2: memref<4xf32, #tpu.memory_space<smem>>) -> (i32, i32, i32) {
    %c0_i32 = arith.constant 0 : i32
    %c0_i32_0 = arith.constant 0 : i32
    return %arg1, %arg0, %c0_i32 : i32, i32, i32
  }
  func.func @transform_1(%arg0: i32, %arg1: i32, %arg2: memref<4xf32, #tpu.memory_space<smem>>) -> (i32, i32) {
    %c0_i32 = arith.constant 0 : i32
    %c0_i32_0 = arith.constant 0 : i32
    return %arg0, %c0_i32 : i32, i32
  }
  func.func @transform_2(%arg0: i32, %arg1: i32, %arg2: memref<4xf32, #tpu.memory_space<smem>>) -> (i32, i32) {
    %c0_i32 = arith.constant 0 : i32
    %c0_i32_0 = arith.constant 0 : i32
    return %arg0, %c0_i32 : i32, i32
  }
  func.func @transform_3(%arg0: i32, %arg1: i32, %arg2: memref<4xf32, #tpu.memory_space<smem>>) -> (i32, i32, i32) {
    %c0_i32 = arith.constant 0 : i32
    %c0_i32_0 = arith.constant 0 : i32
    %c0_i32_1 = arith.constant 0 : i32
    return %arg0, %c0_i32, %c0_i32_0 : i32, i32, i32
  }
}

</mosaic_0001>

<llo_original>
// kernel: tpu_custom_call.1
$region0: #{tpu_custom_call.1}
  #allocation0 [shape = 'u32[]', space=smem, size = 0x4, offset = 0x4, fixed_abs, tag = 'smem constant byte address 0x4 - core index']
  #allocation1 [shape = 'u32[144,128]{1,0:T(1,128)}', space=vmem, size = 0x12000, scoped, tag = 'internal scratch']
  #allocation2 [shape = 'f32[4,128]{1,0:T(4,128)}', space=vmem, size = 0x800, scoped, tag = 'scratch operand']
  #allocation3 [shape = 's32[1]{0}', space=sflag, size = 0x4, scoped, tag = 'scoped memory for tpu_custom_call.1']
  #allocation4 [shape = 'u8[512]{0}', space=smem, size = 0x200, scoped, tag = 'prefetched SMEM operand 0']
  %s0 = inlined_call_operand.hbm [shape: f32[4], index: 0, kind: input, shape index: {}]
  %s1 = inlined_call_operand.hbm [shape: f32[4,4,128], index: 1, kind: input, shape index: {}]
  %s2 = inlined_call_operand.hbm [shape: f32[4,128], index: 2, kind: input, shape index: {}]
  %s3 = inlined_call_operand.vmem [shape: f32[4,128], index: 3, kind: input, shape index: {}]
  %s4 = inlined_call_operand.hbm [shape: f32[1,1,128], index: 4, kind: output, shape index: {}]
  %s5 = sld [smem:[#allocation0]]
  $region65: #{tpu_custom_call.1} parent=0
    _
  %s7 = ssub.s32 1, %s5
  %s8 = scalar_select 0, %s7, %s5
  %10 = dma.hbm_to_smem %s0, 16, [#allocation4], [#allocation3]
  %11 = dma.done [#allocation3], 16
  %12 = sfence
  $region1: #{tpu_custom_call.1} parent=0
    #allocation5 [shape = 'u8[4096]{0}', space=vmem, size = 0x1000, scoped, tag = 'input window, operand 1']
    #allocation6 [shape = 's32[2]{0}', space=sflag, size = 0x8, scoped, tag = 'scoped memory for tpu_custom_call.1']
    #allocation7 [shape = 's32[2]{0}', space=sflag, size = 0x8, scoped, tag = 'scoped memory for tpu_custom_call.1']
    #allocation8 [shape = 'u8[2048]{0}', space=vmem, size = 0x800, scoped, tag = 'input window, operand 2, single buffered']
    #allocation9 [shape = 's32[1]{0}', space=sflag, size = 0x4, scoped, tag = 'scoped memory for tpu_custom_call.1']
    #allocation10 [shape = 'u8[512]{0}', space=vmem, size = 0x400, scoped, tag = 'output window, operand 0, single buffered']
    %13 = vsyncpa [#allocation6], 0
    %s14 = scalar_lea.sflag [#allocation6], 1
    %15 = vsyncpa %s14, 0
    %16 = vsyncpa [#allocation9], 0
    %17 = vsyncpa [#allocation7], 0
    loop: start=0, step=1, limit=6
    $region2: #{tpu_custom_call.1} parent=1 // loop_pre_header
      _
    $region3: #{tpu_custom_call.1} parent=1 // loop_header
      %s19 = sphi 0, %s23
      %p20 = scmp.ge.s32.totalorder %s19, 6
      %s26 = sphi 0, %s38
      %s27 = sphi 0, %s34
      %s28 = sphi 0, %s26
      %s29 = sphi 0, %s27
      %s30 = sphi 0, %s28
      %s31 = sphi 0, %s29
      %s43 = sphi 0, %s45
      %s46 = sphi 0, %s43
      %s47 = sphi 0, %s46
      %s63 = sphi 0, %s47
      %s69 = sphi 0, %s71
      %s72 = sphi 0, %s69
      %s73 = sphi 0, %s72
      %s89 = sphi 0, %s73
      %s95 = sphi 0, %s97
      %s98 = sphi 0, %s95
      %s99 = sphi 0, %s98
      %s115 = sphi 0, %s99
      %s121 = sphi 0, %s123
      %s124 = sphi 0, %s121
      %s125 = sphi 0, %s124
      %s141 = sphi 0, %s125
    $region4: #{tpu_custom_call.1} parent=1 // loop_header_branch
      %22 = sbr.rel (%p20) target = $region8
    $region5: #{tpu_custom_call.1} parent=1 // loop_body
      %s24 = ssub.s32 %s19, 1
      %s25 = ssub.s32 %s19, 2
      %s32 = sadd.s32 1, %s27
      %p33 = scmp.ge.s32.totalorder %s32, 4
      %s34 = scalar_select %p33, 0, %s32
      %s35 = sadd.s32 1, %s26
      %s36 = scalar_select %p33, %s35, %s26
      %p37 = scmp.ge.s32.totalorder %s36, 1
      %s38 = scalar_select %p37, 0, %s36
      %s39 = ssub.s32 %s27, %s34
      %s40 = ssub.s32 %s26, %s38
      %s41 = sor.u32 %s39, %s40
      %p42 = scmp.eq.s32.totalorder %s41, 0
      %s44 = sadd.s32 %s43, 1
      %s45 = scalar_select %p42, %s43, %s44
      %p48 = pneg %p42
      %p49 = scmp.eq.s32.totalorder %s19, 3
      %p50 = por %p48, %p49
      %p51 = scmp.ne.s32.totalorder %s43, %s46
      %p52 = scmp.eq.s32.totalorder %s19, 0
      %p53 = por %p51, %p52
      %p54 = scmp.ne.s32.totalorder %s43, %s46
      %p55 = scmp.eq.s32.totalorder %s24, 3
      %p56 = por %p54, %p55
      %p57 = scmp.ne.s32.totalorder %s46, %s47
      %p58 = scmp.eq.s32.totalorder %s24, 0
      %p59 = por %p57, %p58
      %p60 = scmp.ne.s32.totalorder %s46, %s47
      %p61 = scmp.eq.s32.totalorder %s25, 3
      %p62 = por %p60, %p61
      %p64 = scmp.ne.s32.totalorder %s47, %s63
      %p65 = scmp.eq.s32.totalorder %s25, 0
      %p66 = por %p64, %p65
      %s67 = ssub.s32 %s26, %s38
      %p68 = scmp.eq.s32.totalorder %s67, 0
      %s70 = sadd.s32 %s69, 1
      %s71 = scalar_select %p68, %s69, %s70
      %p74 = pneg %p68
      %p75 = scmp.eq.s32.totalorder %s19, 3
      %p76 = por %p74, %p75
      %p77 = scmp.ne.s32.totalorder %s69, %s72
      %p78 = scmp.eq.s32.totalorder %s19, 0
      %p79 = por %p77, %p78
      %p80 = scmp.ne.s32.totalorder %s69, %s72
      %p81 = scmp.eq.s32.totalorder %s24, 3
      %p82 = por %p80, %p81
      %p83 = scmp.ne.s32.totalorder %s72, %s73
      %p84 = scmp.eq.s32.totalorder %s24, 0
      %p85 = por %p83, %p84
      %p86 = scmp.ne.s32.totalorder %s72, %s73
      %p87 = scmp.eq.s32.totalorder %s25, 3
      %p88 = por %p86, %p87
      %p90 = scmp.ne.s32.totalorder %s73, %s89
      %p91 = scmp.eq.s32.totalorder %s25, 0
      %p92 = por %p90, %p91
      %s93 = ssub.s32 %s26, %s38
      %p94 = scmp.eq.s32.totalorder %s93, 0
      %s96 = sadd.s32 %s95, 1
      %s97 = scalar_select %p94, %s95, %s96
      %p100 = pneg %p94
      %p101 = scmp.eq.s32.totalorder %s19, 3
      %p102 = por %p100, %p101
      %p103 = scmp.ne.s32.totalorder %s95, %s98
      %p104 = scmp.eq.s32.totalorder %s19, 0
      %p105 = por %p103, %p104
      %p106 = scmp.ne.s32.totalorder %s95, %s98
      %p107 = scmp.eq.s32.totalorder %s24, 3
      %p108 = por %p106, %p107
      %p109 = scmp.ne.s32.totalorder %s98, %s99
      %p110 = scmp.eq.s32.totalorder %s24, 0
      %p111 = por %p109, %p110
      %p112 = scmp.ne.s32.totalorder %s98, %s99
      %p113 = scmp.eq.s32.totalorder %s25, 3
      %p114 = por %p112, %p113
      %p116 = scmp.ne.s32.totalorder %s99, %s115
      %p117 = scmp.eq.s32.totalorder %s25, 0
      %p118 = por %p116, %p117
      %s119 = ssub.s32 %s26, %s38
      %p120 = scmp.eq.s32.totalorder %s119, 0
      %s122 = sadd.s32 %s121, 1
      %s123 = scalar_select %p120, %s121, %s122
      %p126 = pneg %p120
      %p127 = scmp.eq.s32.totalorder %s19, 3
      %p128 = por %p126, %p127
      %p129 = scmp.ne.s32.totalorder %s121, %s124
      %p130 = scmp.eq.s32.totalorder %s19, 0
      %p131 = por %p129, %p130
      %p132 = scmp.ne.s32.totalorder %s121, %s124
      %p133 = scmp.eq.s32.totalorder %s24, 3
      %p134 = por %p132, %p133
      %p135 = scmp.ne.s32.totalorder %s124, %s125
      %p136 = scmp.eq.s32.totalorder %s24, 0
      %p137 = por %p135, %p136
      %p138 = scmp.ne.s32.totalorder %s124, %s125
      %p139 = scmp.eq.s32.totalorder %s25, 3
      %p140 = por %p138, %p139
      %p142 = scmp.ne.s32.totalorder %s125, %s141
      %p143 = scmp.eq.s32.totalorder %s25, 0
      %p144 = por %p142, %p143
      %p145 = scmp.le.s32.totalorder 1, %s19
      %p146 = scmp.lt.s32.totalorder %s19, 5
      %p147 = pnand %p145, %p146
      %p148 = pneg %p147
      // Predicated region
      $region9: #{tpu_custom_call.1} parent=5 // pred_check
        _
      $region10: #{tpu_custom_call.1} parent=5 // pred_check_branch
        %150 = sbr.rel (%p147) target = $region12
      $region11: #{tpu_custom_call.1} parent=5 // pred_region
        %s151 = ssub.s32 %s19, 1
        // Predicated region
        $region13: #{tpu_custom_call.1} parent=11 // pred_check
          %p152 = pneg %p85
        $region14: #{tpu_custom_call.1} parent=11 // pred_check_branch
          %154 = sbr.rel (%p152) target = $region16
        $region15: #{tpu_custom_call.1} parent=11 // pred_region
          %s156 = ssub.s32 64, 64
          %157 = vsyncadd [#allocation9], %s156
          %s158 = smul.addr %s28, 64
          %s159 = scalar_lea.hbm %s2, %s158
          %s161 = sshll.u32 [#allocation8], 4
          %s162 = int_to_ptr.vmem [resolvable:$true] %s161
          %164 = dma.hbm_to_vmem [thread:$0]  %s159, 64, %s162, [#allocation9]
        $region16: #{tpu_custom_call.1} parent=11 // pred_fallthru
          _
        // Predicated region
        $region17: #{tpu_custom_call.1} parent=11 // pred_check
          %p165 = pneg %p111
        $region18: #{tpu_custom_call.1} parent=11 // pred_check_branch
          %167 = sbr.rel (%p165) target = $region20
        $region19: #{tpu_custom_call.1} parent=11 // pred_region
          %p168 = scmp.lt.s32.totalorder %s28, 0
          %s169 = scalar_select %p168, %s28, 0
          %s170 = smul.addr %s169, 4
          %s171 = scalar_lea.vmem %s3, %s170
        $region20: #{tpu_custom_call.1} parent=11 // pred_fallthru
          _
      $region12: #{tpu_custom_call.1} parent=5 // pred_fallthru
        _
      %p172 = scmp.lt.s32.totalorder %s19, 4
      // Predicated region
      $region21: #{tpu_custom_call.1} parent=5 // pred_check
        %p173 = pneg %p172
      $region22: #{tpu_custom_call.1} parent=5 // pred_check_branch
        %175 = sbr.rel (%p173) target = $region24
      $region23: #{tpu_custom_call.1} parent=5 // pred_region
        // Predicated region
        $region25: #{tpu_custom_call.1} parent=23 // pred_check
          %p176 = pneg %p53
        $region26: #{tpu_custom_call.1} parent=23 // pred_check_branch
          %178 = sbr.rel (%p176) target = $region28
        $region27: #{tpu_custom_call.1} parent=23 // pred_region
          %s179 = sand.u32 %s43, 1
          %s180 = scalar_lea.sflag [#allocation6], %s179
          %s181 = sand.u32 %s43, 1
          %s182 = smul.addr %s181, 4
          %s183 = scalar_lea.vmem [#allocation5], %s182
          %s185 = ssub.s32 64, 64
          %186 = vsyncadd %s180, %s185
          %s187 = sadd.s32 %s26, %s27
          %s188 = smul.addr %s187, 64
          %s189 = scalar_lea.hbm %s1, %s188
          %s191 = sshll.u32 %s183, 4
          %s192 = int_to_ptr.vmem [resolvable:$true] %s191
          %194 = dma.hbm_to_vmem [thread:$0]  %s189, 64, %s192, %s180
        $region28: #{tpu_custom_call.1} parent=23 // pred_fallthru
          _
      $region24: #{tpu_custom_call.1} parent=5 // pred_fallthru
        _
      %p195 = scmp.le.s32.totalorder 1, %s19
      %p196 = scmp.lt.s32.totalorder %s19, 5
      %p197 = pnand %p195, %p196
      %p198 = pneg %p197
      // Predicated region
      $region29: #{tpu_custom_call.1} parent=5 // pred_check
        _
      $region30: #{tpu_custom_call.1} parent=5 // pred_check_branch
        %200 = sbr.rel (%p197) target = $region32
      $region31: #{tpu_custom_call.1} parent=5 // pred_region
        %s201 = ssub.s32 %s19, 1
        %s202 = sand.u32 %s46, 1
        %s203 = scalar_lea.sflag [#allocation6], %s202
        %s204 = sand.u32 %s46, 1
        %s205 = smul.addr %s204, 4
        %s206 = scalar_lea.vmem [#allocation5], %s205
        // Predicated region
        $region33: #{tpu_custom_call.1} parent=31 // pred_check
          %p207 = pneg %p59
        $region34: #{tpu_custom_call.1} parent=31 // pred_check_branch
          %209 = sbr.rel (%p207) target = $region36
        $region35: #{tpu_custom_call.1} parent=31 // pred_region
          %210 = dma.done %s203, 64
        $region36: #{tpu_custom_call.1} parent=31 // pred_fallthru
          _
        // Predicated region
        $region37: #{tpu_custom_call.1} parent=31 // pred_check
          %p211 = pneg %p85
        $region38: #{tpu_custom_call.1} parent=31 // pred_check_branch
          %213 = sbr.rel (%p211) target = $region40
        $region39: #{tpu_custom_call.1} parent=31 // pred_region
          %214 = dma.done [#allocation9], 64
        $region40: #{tpu_custom_call.1} parent=31 // pred_fallthru
          _
        %s215 = sand.u32 %s46, 1
        %s216 = scalar_lea.sflag [#allocation6], %s215
        %s217 = sand.u32 %s46, 1
        %s218 = smul.addr %s217, 4
        %s219 = scalar_lea.vmem [#allocation5], %s218
        %p220 = pneg %p59
        %p221 = pneg %p56
        %p222 = pneg %p85
        %p223 = pneg %p82
        %p224 = scmp.lt.s32.totalorder %s28, 0
        %s225 = scalar_select %p224, %s28, 0
        %s226 = smul.addr %s225, 4
        %s227 = scalar_lea.vmem %s3, %s226
        %p228 = pneg %p111
        %p229 = pneg %p108
        %p230 = pneg %p137
        %p231 = pneg %p134
        %p232 = scmp.lt.s32.totalorder %s28, 0
        %s233 = scalar_select %p232, %s28, 0
        %s234 = smul.addr %s233, 4
        %s235 = scalar_lea.vmem %s3, %s234
        %v236 = vld [vmem:[%s206] sm:$0xf]
        %v237 = vld [vmem:[#allocation8] sm:$0xf]
        %s238 = sld [smem:[#allocation4 + %s29]]
        %v239 = vsub.f32 %v236, %v237
        %v240 = vand.u32 2147483647, %v239
        %v241 = vstv %s238
        %v242 = vmul.f32 %v240, %v241
        %p243 = scmp.eq.s32.totalorder %s29, 0
        // Predicated region
        $region41: #{tpu_custom_call.1} parent=31 // pred_check
          %p244 = pneg %p243
        $region42: #{tpu_custom_call.1} parent=31 // pred_check_branch
          %246 = sbr.rel (%p244) target = $region44
        $region43: #{tpu_custom_call.1} parent=31 // pred_region
          %247 = vst [vmem:[#allocation2] sm:$0xf] %v242
        $region44: #{tpu_custom_call.1} parent=31 // pred_fallthru
          _
        %p248 = scmp.gt.s32.totalorder %s29, 0
        // Predicated region
        $region45: #{tpu_custom_call.1} parent=31 // pred_check
          %p249 = pneg %p248
        $region46: #{tpu_custom_call.1} parent=31 // pred_check_branch
          %251 = sbr.rel (%p249) target = $region48
        $region47: #{tpu_custom_call.1} parent=31 // pred_region
          %v252 = vld [vmem:[#allocation2] sm:$0xf]
          %v253 = vadd.f32 %v252, %v242
          %254 = vst [vmem:[#allocation2] sm:$0xf] %v253
        $region48: #{tpu_custom_call.1} parent=31 // pred_fallthru
          _
        %p255 = scmp.eq.s32.totalorder %s29, 3
        // Predicated region
        $region49: #{tpu_custom_call.1} parent=31 // pred_check
          %p256 = pneg %p255
        $region50: #{tpu_custom_call.1} parent=31 // pred_check_branch
          %258 = sbr.rel (%p256) target = $region52
        $region51: #{tpu_custom_call.1} parent=31 // pred_region
          %v259 = vld [vmem:[%s235] sm:$0xf]
          %v260 = vld [vmem:[#allocation2] sm:$0xf]
          %v261 = vmul.f32 %v260, %v259
          %vm262 = vcmask 1043456
          %v263 = vsel %vm262, %v261, 0.0
          %264 = vadd.xlane.f32.xlu0 %v263
          %v265 = vpop.xlane.xlu0 %264
          %v266 = vrot.slane %v265, 4
          %v267 = vadd.f32 %v265, %v266
          %v268 = vrot.slane %v267, 2
          %v269 = vadd.f32 %v267, %v268
          %v270 = vrot.slane %v269, 1
          %v271 = vadd.f32 %v269, %v270
          %s272 = vtos %v271
          %v273 = vsel %vm262, %v259, 0.0
          %274 = vadd.xlane.f32.xlu0 %v273
          %v275 = vpop.xlane.xlu0 %274
          %v276 = vrot.slane %v275, 4
          %v277 = vadd.f32 %v275, %v276
          %v278 = vrot.slane %v277, 2
          %v279 = vadd.f32 %v277, %v278
          %v280 = vrot.slane %v279, 1
          %v281 = vadd.f32 %v279, %v280
          %s282 = vtos %v281
          %v283 = vlaneseq
          %v284 = vand.u32 %v283, 127
          %vm285 = vcmp.eq.s32.totalorder %v284, 0
          %vm286 = vcmp.eq.s32.totalorder %v284, 1
          %v287 = vstv %s282
          %v288 = vsel %vm286, %v287, 0.0
          %v289 = vstv %s272
          %v290 = vsel %vm285, %v289, %v288
          %291 = vst [vmem:[#allocation10] sm:$0x1] %v290
        $region52: #{tpu_custom_call.1} parent=31 // pred_fallthru
          _
        // Predicated region
        $region53: #{tpu_custom_call.1} parent=31 // pred_check
          %p292 = pneg %p134
        $region54: #{tpu_custom_call.1} parent=31 // pred_check_branch
          %294 = sbr.rel (%p292) target = $region56
        $region55: #{tpu_custom_call.1} parent=31 // pred_region
          %s296 = ssub.s32 16, 16
          %297 = vsyncadd [#allocation7], %s296
          %s298 = smul.addr %s28, 16
          %s299 = scalar_lea.hbm %s4, %s298
          %s301 = sshll.u32 [#allocation10], 4
          %s302 = int_to_ptr.vmem [resolvable:$true] %s301
          %304 = dma.vmem_to_hbm [thread:$0]  %s302, 16, %s299, [#allocation7]
        $region56: #{tpu_custom_call.1} parent=31 // pred_fallthru
          _
        // Predicated region
        $region57: #{tpu_custom_call.1} parent=31 // pred_check
          %p305 = pneg %p134
        $region58: #{tpu_custom_call.1} parent=31 // pred_check_branch
          %307 = sbr.rel (%p305) target = $region60
        $region59: #{tpu_custom_call.1} parent=31 // pred_region
          %308 = dma.done [#allocation7], 16
        $region60: #{tpu_custom_call.1} parent=31 // pred_fallthru
          _
      $region32: #{tpu_custom_call.1} parent=5 // pred_fallthru
        _
      %p309 = scmp.le.s32.totalorder 2, %s19
      // Predicated region
      $region61: #{tpu_custom_call.1} parent=5 // pred_check
        %p310 = pneg %p309
      $region62: #{tpu_custom_call.1} parent=5 // pred_check_branch
        %312 = sbr.rel (%p310) target = $region64
      $region63: #{tpu_custom_call.1} parent=5 // pred_region
        %s313 = ssub.s32 %s19, 2
      $region64: #{tpu_custom_call.1} parent=5 // pred_fallthru
        _
    $region6: #{tpu_custom_call.1} parent=1 // loop_footer
      %s23 = sadd.s32 1, %s19
    $region7: #{tpu_custom_call.1} parent=1 // loop_footer_branch
      %18 = sbr.rel target = $region3
    $region8: #{tpu_custom_call.1} parent=1 // loop_exit
      _
    %314 = vsyncpa [#allocation6], 1
    %s315 = scalar_lea.sflag [#allocation6], 1
    %316 = vsyncpa %s315, 1
    %317 = vsyncpa [#allocation9], 1
    %318 = vsyncpa [#allocation7], 1
    %s319 = scalar_lea.sflag [#allocation7], 1
    %320 = vsyncpa %s319, 1

</llo_original>
